<compile_context>
chip_gen: v7x
topology: tpu7x:2x2x1
jax: 0.10.0
libtpu: 0.0.40
codegen_flags: <defaults>
</compile_context>

<pallas_src>
import functools

import jax
import jax.numpy as jnp
from jax import lax
from jax.experimental import pallas as pl
from jax.experimental.pallas import tpu as pltpu

EPS = 1e-5


def _round_up(x, m):
    return (x + m - 1) // m * m


# --------------------------------------------------------------------------
# Kernel 1: per-tile partial sums of x and x*x (for BN1 batch statistics).
# Padded rows of x are zero, so they contribute nothing -> no masking needed.
# --------------------------------------------------------------------------
def _stats_kernel(x_ref, s_ref):
    x = x_ref[...]                                         # (TILE_N, D_pad) f32
    s = jnp.concatenate(
        [jnp.sum(x, axis=0, keepdims=True),
         jnp.sum(x * x, axis=0, keepdims=True)], axis=0)   # (2, D_pad)
    s_ref[...] = s[None]                                   # (1, 2, D_pad)


# --------------------------------------------------------------------------
# Kernel 2: h = ReLU(x @ W1' + b1') with BN1 already folded into W1'/b1'.
# Also emits per-tile partial sums of h and h*h (for BN2 batch statistics),
# masking padded rows so they do not pollute the statistics.
# --------------------------------------------------------------------------
def _linear_relu_stats_kernel(x_ref, w_ref, b_ref, h_ref, s_ref, *,
                              tile_n, n_valid, mask_rows, mm_dtype):
    x = x_ref[...]
    w = w_ref[...]
    if mm_dtype != jnp.float32:                            # optional bf16 MXU path
        x = x.astype(mm_dtype)
        w = w.astype(mm_dtype)
    h = jnp.dot(x, w, preferred_element_type=jnp.float32) + b_ref[...]
    h = jnp.maximum(h, 0.0)
    if mask_rows:                                          # static Python flag
        row = pl.program_id(0) * tile_n + lax.broadcasted_iota(jnp.int32, h.shape, 0)
        h = jnp.where(row < n_valid, h, 0.0)
    h_ref[...] = h
    s_ref[...] = jnp.concatenate(
        [jnp.sum(h, axis=0, keepdims=True),
         jnp.sum(h * h, axis=0, keepdims=True)], axis=0)[None]


# --------------------------------------------------------------------------
# Kernel 3: out = ReLU(ReLU(h @ W2' + b2') + x), BN2 folded into W2'/b2'.
# --------------------------------------------------------------------------
def _linear_relu_residual_kernel(h_ref, x_ref, w_ref, b_ref, o_ref, *, mm_dtype):
    h = h_ref[...]
    w = w_ref[...]
    if mm_dtype != jnp.float32:
        h = h.astype(mm_dtype)
        w = w.astype(mm_dtype)
    z = jnp.dot(h, w, preferred_element_type=jnp.float32) + b_ref[...]
    z = jnp.maximum(z, 0.0)
    o_ref[...] = jnp.maximum(z + x_ref[...], 0.0)


def _fold_bn_into_linear(mu, var, gamma, beta, w, b):
    """BN(x) @ W + b == x @ W' + b' with W' = a[:,None]*W, b' = (beta - mu*a) @ W + b."""
    a = gamma * lax.rsqrt(var + EPS)
    c = beta - mu * a
    return a[:, None] * w, c @ w + b


def res_block_1d(x, params, *, tile_n=256, use_bf16_matmul=False):
    """x: (N, D) float32.  params: dict of per-layer parameters (torch layout)."""
    N, D = x.shape
    f32 = jnp.float32
    mm_dtype = jnp.bfloat16 if use_bf16_matmul else f32

    # Lane-dense feature padding (multiple of 128) and sublane-aligned row tiles.
    D_pad = _round_up(D, 128)
    TILE_N = min(_round_up(N, 8), _round_up(tile_n, 8))
    N_pad = _round_up(N, TILE_N)
    n_tiles = N_pad // TILE_N

    def pad_vec(v):
        return jnp.zeros((D_pad,), f32).at[:D].set(v.astype(f32))

    x_p = jnp.zeros((N_pad, D_pad), f32).at[:N, :D].set(x.astype(f32))
    w1_p = jnp.zeros((D_pad, D_pad), f32).at[:D, :D].set(params["w1"].T.astype(f32))
    w2_p = jnp.zeros((D_pad, D_pad), f32).at[:D, :D].set(params["w2"].T.astype(f32))
    g1, be1, b1 = pad_vec(params["bn1_gamma"]), pad_vec(params["bn1_beta"]), pad_vec(params["b1"])
    g2, be2, b2 = pad_vec(params["bn2_gamma"]), pad_vec(params["bn2_beta"]), pad_vec(params["b2"])

    cparams = pltpu.CompilerParams(
        dimension_semantics=("parallel",),          # megacore split on v7x
        vmem_limit_bytes=32 * 1024 * 1024,          # safe on v5e/v6e/v7x
    )

    row_spec = pl.BlockSpec((TILE_N, D_pad), lambda i: (i, 0))
    res_w_spec = pl.BlockSpec((D_pad, D_pad), lambda i: (0, 0))   # resident weights
    res_b_spec = pl.BlockSpec((1, D_pad), lambda i: (0, 0))       # resident bias
    stats_spec = pl.BlockSpec((1, 2, D_pad), lambda i: (i, 0, 0))

    # ---- Pass 1: BN1 batch statistics (per-tile partial sums, reduced in wrapper).
    part1 = pl.pallas_call(
        _stats_kernel,
        out_shape=jax.ShapeDtypeStruct((n_tiles, 2, D_pad), f32),
        grid=(n_tiles,),
        in_specs=[row_spec],
        out_specs=stats_spec,
        compiler_params=cparams,
    )(x_p)
    s1 = jnp.sum(part1, axis=0)
    mu1 = s1[0] / N
    var1 = s1[1] / N - mu1 * mu1                 # biased (training-mode) variance
    w1_f, b1_f = _fold_bn_into_linear(mu1, var1, g1, be1, w1_p, b1)

    # ---- Pass 2: h1 = ReLU(x @ W1' + b1')  + per-tile h1 statistics for BN2.
    k2 = functools.partial(_linear_relu_stats_kernel, tile_n=TILE_N, n_valid=N,
                           mask_rows=(N_pad != N), mm_dtype=mm_dtype)
    h1_p, part2 = pl.pallas_call(
        k2,
        out_shape=(jax.ShapeDtypeStruct((N_pad, D_pad), f32),
                   jax.ShapeDtypeStruct((n_tiles, 2, D_pad), f32)),
        grid=(n_tiles,),
        in_specs=[row_spec, res_w_spec, res_b_spec],
        out_specs=(row_spec, stats_spec),
        compiler_params=cparams,
    )(x_p, w1_f, b1_f.reshape(1, D_pad))
    s2 = jnp.sum(part2, axis=0)
    mu2 = s2[0] / N
    var2 = s2[1] / N - mu2 * mu2
    w2_f, b2_f = _fold_bn_into_linear(mu2, var2, g2, be2, w2_p, b2)

    # ---- Pass 3: out = ReLU(ReLU(h1 @ W2' + b2') + x).
    out_p = pl.pallas_call(
        functools.partial(_linear_relu_residual_kernel, mm_dtype=mm_dtype),
        out_shape=jax.ShapeDtypeStruct((N_pad, D_pad), f32),
        grid=(n_tiles,),
        in_specs=[row_spec, row_spec, res_w_spec, res_b_spec],
        out_specs=row_spec,
        compiler_params=cparams,
    )(h1_p, x_p, w2_f, b2_f.reshape(1, D_pad))

    return out_p[:N, :D]


# --------------------------------------------------------------------------
# Pure-JAX reference matching the PyTorch forward (training-mode BatchNorm1d).
# --------------------------------------------------------------------------
def _reference(x, params):
    def bn(h, g, b):
        mu = jnp.mean(h, axis=0, keepdims=True)
        var = jnp.mean((h - mu) ** 2, axis=0, keepdims=True)
        return (h - mu) / jnp.sqrt(var + EPS) * g + b

    h = bn(x, params["bn1_gamma"], params["bn1_beta"])
    h = jnp.maximum(h @ params["w1"].T + params["b1"], 0.0)
    h = bn(h, params["bn2_gamma"], params["bn2_beta"])
    h = jnp.maximum(h @ params["w2"].T + params["b2"], 0.0)
    return jnp.maximum(h + x, 0.0)


def _make_params(key, D):
    kg1, kb1, kw1, kbb1, kg2, kb2, kw2, kbb2 = jax.random.split(key, 8)
    return {
        "bn1_gamma": 1.0 + 0.1 * jax.random.normal(kg1, (D,), dtype=jnp.float32),
        "bn1_beta":  0.1 * jax.random.normal(kb1, (D,), dtype=jnp.float32),
        "w1": jax.random.normal(kw1, (D, D), dtype=jnp.float32) / jnp.sqrt(D),
        "b1": 0.1 * jax.random.normal(kbb1, (D,), dtype=jnp.float32),
        "bn2_gamma": 1.0 + 0.1 * jax.random.normal(kg2, (D,), dtype=jnp.float32),
        "bn2_beta":  0.1 * jax.random.normal(kb2, (D,), dtype=jnp.float32),
        "w2": jax.random.normal(kw2, (D, D), dtype=jnp.float32) / jnp.sqrt(D),
        "b2": 0.1 * jax.random.normal(kbb2, (D,), dtype=jnp.float32),
    }


if __name__ == "__main__":
    key = jax.random.PRNGKey(0)
    k1, k2, k3, k4 = jax.random.split(key, 4)

    # Test 1: toy size implied by the module (batch=8, in_dim=out_dim=32).
    N, D = 8, 32
    x = jax.random.normal(k1, (N, D), dtype=jnp.float32)
    params = _make_params(k2, D)
    out = jax.block_until_ready(res_block_1d(x, params))
    ref = _reference(x, params)
    assert out.shape == (N, D)
    assert jnp.allclose(out, ref, atol=1e-4, rtol=1e-4), "mismatch vs reference (8,32)"

    # Test 2: non-aligned batch exercising multi-tile grid, row masking and padding.
    N2, D2 = 300, 32
    x2 = jax.random.normal(k3, (N2, D2), dtype=jnp.float32)
    params2 = _make_params(k4, D2)
    out2 = jax.block_until_ready(res_block_1d(x2, params2, tile_n=128))
    ref2 = _reference(x2, params2)
    assert out2.shape == (N2, D2)
    assert jnp.allclose(out2, ref2, atol=1e-4, rtol=1e-4), "mismatch vs reference (300,32)"

    print("KERNEL_OK")
</pallas_src>

<mosaic_0001>
module attributes {stable_mosaic.version = 11 : i64} {
  func.func @_stats_kernel(%arg0: i32, %arg1: memref<8x128xf32, #tpu.memory_space<vmem>>, %arg2: memref<1x2x128xf32, #tpu.memory_space<vmem>>) attributes {dimension_semantics = [#tpu.dimension_semantics<parallel>], iteration_bounds = array<i64: 1>, scalar_prefetch = 0 : i64, scratch_operands = 0 : i64, tpu.core_type = #tpu.core_type<tc>, window_params = [{transform_indices = @transform_0, window_bounds = array<i64: 8, 128>}, {transform_indices = @transform_1, window_bounds = array<i64: 1, 2, 128>}]} {
    %c0 = arith.constant 0 : index
    %c0_0 = arith.constant 0 : index
    %0 = vector.load %arg1[%c0, %c0_0] : memref<8x128xf32, #tpu.memory_space<vmem>>, vector<8x128xf32>
    %cst = arith.constant dense<0.000000e+00> : vector<128xf32>
    %1 = vector.multi_reduction <add>, %0, %cst [0] : vector<8x128xf32> to vector<128xf32>
    %2 = vector.shape_cast %1 : vector<128xf32> to vector<1x128xf32>
    %3 = arith.mulf %0, %0 : vector<8x128xf32>
    %cst_1 = arith.constant dense<0.000000e+00> : vector<128xf32>
    %4 = vector.multi_reduction <add>, %3, %cst_1 [0] : vector<8x128xf32> to vector<128xf32>
    %5 = vector.shape_cast %4 : vector<128xf32> to vector<1x128xf32>
    %6 = tpu.concatenate %2, %5 in 0 : vector<1x128xf32>, vector<1x128xf32> -> vector<2x128xf32>
    %7 = vector.shape_cast %6 : vector<2x128xf32> to vector<1x2x128xf32>
    %c0_2 = arith.constant 0 : index
    %c0_3 = arith.constant 0 : index
    %c0_4 = arith.constant 0 : index
    %8 = vector.load %arg2[%c0_2, %c0_3, %c0_4] : memref<1x2x128xf32, #tpu.memory_space<vmem>>, vector<1x2x128xf32>
    tpu.vector_store %arg2[%c0_2, %c0_3, %c0_4], %7 {strides = array<i32>} : memref<1x2x128xf32, #tpu.memory_space<vmem>>, vector<1x2x128xf32>,
    return
  }
  func.func @transform_0(%arg0: i32) -> (i32, i32) {
    %c0_i32 = arith.constant 0 : i32
    %c0_i32_0 = arith.constant 0 : i32
    return %arg0, %c0_i32 : i32, i32
  }
  func.func @transform_1(%arg0: i32) -> (i32, i32, i32) {
    %c0_i32 = arith.constant 0 : i32
    %c0_i32_0 = arith.constant 0 : i32
    %c0_i32_1 = arith.constant 0 : i32
    return %arg0, %c0_i32, %c0_i32_0 : i32, i32, i32
  }
}

</mosaic_0001>

<llo_original>
// kernel: tpu_custom_call.1
$region0: #{tpu_custom_call.1}
  #allocation0 [shape = 'u32[]', space=smem, size = 0x4, offset = 0x4, fixed_abs, tag = 'smem constant byte address 0x4 - core index']
  #allocation1 [shape = 'u32[144,128]{1,0:T(1,128)}', space=vmem, size = 0x12000, scoped, tag = 'internal scratch']
  %s0 = inlined_call_operand.hbm [shape: f32[8,128], index: 0, kind: input, shape index: {}]
  %s1 = inlined_call_operand.hbm [shape: f32[1,2,128], index: 1, kind: output, shape index: {}]
  %s2 = sld [smem:[#allocation0]]
  $region18: #{tpu_custom_call.1} parent=0
    _
  %s4 = ssub.s32 1, %s2
  %s5 = scalar_select 0, %s4, %s2
  $region1: #{tpu_custom_call.1} parent=0
    #allocation2 [shape = 'u8[4096]{0}', space=vmem, size = 0x1000, scoped, tag = 'input window, operand 0, single buffered']
    #allocation3 [shape = 's32[1]{0}', space=sflag, size = 0x4, scoped, tag = 'scoped memory for tpu_custom_call.1']
    #allocation4 [shape = 's32[1]{0}', space=sflag, size = 0x4, scoped, tag = 'scoped memory for tpu_custom_call.1']
    #allocation5 [shape = 'u8[1024]{0}', space=vmem, size = 0x400, scoped, tag = 'output window, operand 0, single buffered']
    %6 = vsyncpa [#allocation3], 0
    %7 = vsyncpa [#allocation4], 0
    // Predicated region
    $region2: #{tpu_custom_call.1} parent=1 // pred_check
      _
    $region3: #{tpu_custom_call.1} parent=1 // pred_check_branch
      %9 = sbr.rel (0) target = $region5
    $region4: #{tpu_custom_call.1} parent=1 // pred_region
      %s11 = ssub.s32 128, 128
      %12 = vsyncadd [#allocation3], %s11
      %s14 = sshll.u32 [#allocation2], 4
      %s15 = int_to_ptr.vmem [resolvable:$true] %s14
      %17 = dma.hbm_to_vmem [thread:$0]  %s0, 128, %s15, [#allocation3]
    $region5: #{tpu_custom_call.1} parent=1 // pred_fallthru
      _
    // Predicated region
    $region6: #{tpu_custom_call.1} parent=1 // pred_check
      _
    $region7: #{tpu_custom_call.1} parent=1 // pred_check_branch
      %19 = sbr.rel (0) target = $region9
    $region8: #{tpu_custom_call.1} parent=1 // pred_region
      %20 = dma.done [#allocation3], 128
    $region9: #{tpu_custom_call.1} parent=1 // pred_fallthru
      _
    %v21 = vld [vmem:[#allocation2] sm:$0xff]
    %v22 = vrot.slane %v21, 4
    %v23 = vadd.f32 %v21, %v22
    %v24 = vrot.slane %v23, 2
    %v25 = vadd.f32 %v23, %v24
    %v26 = vrot.slane %v25, 1
    %v27 = vadd.f32 %v25, %v26
    %v28 = vmul.f32 %v21, %v21
    %v29 = vrot.slane %v28, 4
    %v30 = vadd.f32 %v28, %v29
    %v31 = vrot.slane %v30, 2
    %v32 = vadd.f32 %v30, %v31
    %v33 = vrot.slane %v32, 1
    %v34 = vadd.f32 %v32, %v33
    %vm35 = vcmask 1040384
    %v36 = vsel %vm35, %v27, %v34
    %37 = vst [vmem:[#allocation5] sm:$0x3] %v36
    // Predicated region
    $region10: #{tpu_custom_call.1} parent=1 // pred_check
      _
    $region11: #{tpu_custom_call.1} parent=1 // pred_check_branch
      %39 = sbr.rel (0) target = $region13
    $region12: #{tpu_custom_call.1} parent=1 // pred_region
      %s41 = ssub.s32 32, 32
      %42 = vsyncadd [#allocation4], %s41
      %s44 = sshll.u32 [#allocation5], 4
      %s45 = int_to_ptr.vmem [resolvable:$true] %s44
      %47 = dma.vmem_to_hbm [thread:$0]  %s45, 32, %s1, [#allocation4]
    $region13: #{tpu_custom_call.1} parent=1 // pred_fallthru
      _
    // Predicated region
    $region14: #{tpu_custom_call.1} parent=1 // pred_check
      _
    $region15: #{tpu_custom_call.1} parent=1 // pred_check_branch
      %49 = sbr.rel (0) target = $region17
    $region16: #{tpu_custom_call.1} parent=1 // pred_region
      %50 = dma.done [#allocation4], 32
    $region17: #{tpu_custom_call.1} parent=1 // pred_fallthru
      _
    %51 = vsyncpa [#allocation3], 1
    %52 = vsyncpa [#allocation4], 1

</llo_original>
